<compile_context>
chip_gen: v7x
topology: tpu7x:2x2x1
jax: 0.10.0
libtpu: 0.0.40
codegen_flags: <defaults>
</compile_context>

<pallas_src>
import functools

import jax
import jax.numpy as jnp
import numpy as np
from jax import lax
from jax.experimental import pallas as pl
from jax.experimental.pallas import tpu as pltpu


@functools.lru_cache(maxsize=None)
def _roll_matches_np_roll() -> bool:
    """Probes pltpu.roll's rotate direction once on device.

    Returns True iff pltpu.roll follows np.roll semantics
    (result[i] = x[(i - shift) % n]).  The main kernel needs a rotation by
    `+s` positions (result[i] = x[(i + s) % n]); probing the convention keeps
    the kernel independent of the rotate-direction convention.
    """
    def probe(x_ref, o_ref):
        o_ref[...] = pltpu.roll(x_ref[...], 1, axis=1)

    x = jnp.broadcast_to(jnp.arange(128, dtype=jnp.float32), (8, 128))
    out = pl.pallas_call(
        probe, out_shape=jax.ShapeDtypeStruct((8, 128), jnp.float32))(x)
    return float(out[0, 0]) == 127.0


def _phase_matmul_kernel(x_ref, w_ref, b_ref, o_ref, *, B_blk, HW, HW_pad, shifts):
    # x_ref: (B_blk, Cin, HW)        channel-major images, flattened H*W on lanes
    # w_ref: (4*Cout, 4*Cin)         phase-combined weights, 4 taps merged (K=4*Cin)
    # b_ref: (4*Cout, 1)             bias replicated over the 4 output phases
    # o_ref: (B_blk, 4*Cout, HW_pad) 4 phases stacked on sublanes, lane-dense
    cols = []
    for b in range(B_blk):                      # static unroll over the batch block
        xb = x_ref[b]                           # (Cin, HW)
        # Four sub-pixel taps (dq, dr) in {0,1}^2 as XLU lane rotations: tap j
        # holds x[ci, q*W + r + s_j] (circular).  Wrapped / next-row values only
        # feed output rows/cols that the final crop to (2H-1, 2W-1) discards, so
        # no zero tail / padded image is needed at all.
        taps = [xb] + [pltpu.roll(xb, s, axis=1) for s in shifts]
        col = jnp.concatenate(taps, axis=0)     # (4*Cin, HW)
        if HW_pad != HW:                        # keep output stores 128-lane dense (v5e)
            col = jnp.concatenate(
                [col, jnp.zeros((col.shape[0], HW_pad - HW), col.dtype)], axis=1)
        cols.append(col)
    # Single MXU contraction for the whole batch block (one issue/drain, MRB
    # in-place accumulation on v7x): (4Cout, 4Cin) @ (4Cin, B_blk*HW_pad).
    rhs = cols[0] if B_blk == 1 else jnp.concatenate(cols, axis=1)
    acc = jnp.dot(w_ref[...], rhs, preferred_element_type=jnp.float32) + b_ref[...]
    for b in range(B_blk):                      # lane-aligned when HW_pad % 128 == 0
        o_ref[b] = acc[:, b * HW_pad:(b + 1) * HW_pad].astype(o_ref.dtype)


@functools.partial(jax.jit, static_argnames=("stride", "padding", "roll_matches_np"))
def _upsample_conv_impl(x, weight, bias, *, stride, padding, roll_matches_np):
    N, Cin, H, W = x.shape
    Cin_w, Cout, K, K2 = weight.shape
    assert Cin == Cin_w and K == K2
    # TODO(synk): the phase decomposition is specialized to the module's
    # canonical UpsampleConvLayer config (kernel_size=3, stride=2, padding=1).
    assert K == 3 and stride == 2 and padding == 1
    assert H >= 2 and W >= 2
    OH = (H - 1) * stride - 2 * padding + K      # = 2H - 1
    OW = (W - 1) * stride - 2 * padding + K      # = 2W - 1
    HW = H * W
    HW_pad = ((HW + 127) // 128) * 128           # lane-dense output stores

    # ---- weights: phase-combined, all four taps merged into one K = 4*Cin matmul.
    # Row-block p = 2*ph + pw (output phase), column-block j = 2*dq + dr (input tap):
    # out[2q+ph, 2r+pw] = sum_j  w_big[p-block, j-block] . x[:, q+dq, r+dr]
    # (derived from oh = 2*ih - padding + kh for ConvTranspose2d).
    wt = jnp.transpose(weight, (2, 3, 1, 0))     # (kh, kw, Cout, Cin)
    z = jnp.zeros((Cout, Cin), weight.dtype)
    w_big = jnp.concatenate([
        jnp.concatenate([wt[1, 1], z,        z,        z       ], axis=1),  # p=(0,0)
        jnp.concatenate([wt[1, 2], wt[1, 0], z,        z       ], axis=1),  # p=(0,1)
        jnp.concatenate([wt[2, 1], z,        wt[0, 1], z       ], axis=1),  # p=(1,0)
        jnp.concatenate([wt[2, 2], wt[2, 0], wt[0, 2], wt[0, 0]], axis=1),  # p=(1,1)
    ], axis=0)                                   # (4*Cout, 4*Cin)
    b_all = jnp.tile(bias, 4).reshape(4 * Cout, 1)

    # ---- input: channel-major, lane-dense, NO host-side pad (saves a full HBM
    # pass over x); the kernel's circular lane rotations make padding unnecessary.
    x_flat = x.reshape(N, Cin, HW)

    # Batch blocking: amortize per-grid-step overhead, but keep >= 2 grid steps
    # when possible so v7x megacore still has a parallel axis to split.
    candidates = [b for b in (8, 4, 2, 1) if N % b == 0 and N // b >= 2]
    B_blk = candidates[0] if candidates else 1

    s_raw = (1, W, W + 1)                        # taps (0,1), (1,0), (1,1)
    shifts = tuple((HW - s) if roll_matches_np else s for s in s_raw)

    kernel = functools.partial(_phase_matmul_kernel, B_blk=B_blk, HW=HW,
                               HW_pad=HW_pad, shifts=shifts)
    # NOTE: weight/bias blocks are grid-invariant and tiny; default double
    # buffering wastes only a few KB here (pl.Buffered(1) left out on purpose).
    # TODO(synk): for large images (e.g. Cin=64, 256x256) add an H-tile grid
    # axis (+1 halo row) and set vmem_limit_bytes so blocks fit v7x's 64 MiB VMEM.
    # TODO(synk): optionally cast x / w_big to bf16 (f32 accumulation) for the
    # full-rate MXU path on v6e/v7x; kept f32 here to preserve the 1e-4 check.
    out_ph = pl.pallas_call(
        kernel,
        out_shape=jax.ShapeDtypeStruct((N, 4 * Cout, HW_pad), x.dtype),
        grid=(N // B_blk,),
        in_specs=[
            pl.BlockSpec((B_blk, Cin, HW), lambda n: (n, 0, 0)),
            pl.BlockSpec((4 * Cout, 4 * Cin), lambda n: (0, 0)),
            pl.BlockSpec((4 * Cout, 1), lambda n: (0, 0)),
        ],
        out_specs=pl.BlockSpec((B_blk, 4 * Cout, HW_pad), lambda n: (n, 0, 0)),
        compiler_params=pltpu.CompilerParams(dimension_semantics=("parallel",)),
    )(x_flat, w_big, b_all)

    # Pixel-shuffle epilogue: interleave the 4 phases into (2H, 2W) and crop the
    # wrap-around row/column.  XLA fuses reshape+transpose+slice into one copy.
    # TODO(synk): fold the pw/ph lane interleave into the kernel to drop this
    # last output-sized pass; kept in the wrapper because Mosaic lane-interleave
    # reshapes are fragile to lower.
    if HW_pad != HW:
        out_ph = out_ph[:, :, :HW]
    out = out_ph.reshape(N, 2, 2, Cout, H, W)
    out = jnp.transpose(out, (0, 3, 4, 1, 5, 2)).reshape(N, Cout, 2 * H, 2 * W)
    return out[:, :, :OH, :OW]


def upsample_conv_layer(x, weight, bias, *, stride=2, padding=1):
    """Forward of nn.ConvTranspose2d(Cin, Cout, 3, stride=2, padding=1).

    x:      (N, Cin, H, W) float32   (NCHW, PyTorch convention)
    weight: (Cin, Cout, K, K)        (PyTorch ConvTranspose2d layout)
    bias:   (Cout,)
    returns (N, Cout, OH, OW) with OH = (H-1)*stride - 2*padding + K
    """
    return _upsample_conv_impl(x, weight, bias, stride=stride, padding=padding,
                               roll_matches_np=_roll_matches_np_roll())


if __name__ == "__main__":
    # UpsampleConvLayer(in_channels=4, out_channels=8, kernel_size=3, stride=2)
    N, Cin, H, W = 4, 4, 16, 16
    Cout, K, stride, padding = 8, 3, 2, 1

    key = jax.random.PRNGKey(0)
    k1, k2, k3 = jax.random.split(key, 3)
    x = jax.random.normal(k1, (N, Cin, H, W), jnp.float32)
    bound = 1.0 / float(np.sqrt(Cin * K * K))
    weight = jax.random.uniform(k2, (Cin, Cout, K, K), jnp.float32, -bound, bound)
    bias = jax.random.uniform(k3, (Cout,), jnp.float32, -bound, bound)

    out = jax.block_until_ready(
        upsample_conv_layer(x, weight, bias, stride=stride, padding=padding))

    # Reference: transposed conv expressed as an lhs-dilated conv (matches
    # torch.nn.ConvTranspose2d(stride=2, padding=1) semantics).
    ref = lax.conv_general_dilated(
        x,
        jnp.transpose(weight[:, :, ::-1, ::-1], (1, 0, 2, 3)),   # (Cout, Cin, K, K)
        window_strides=(1, 1),
        padding=[(K - 1 - padding, K - 1 - padding)] * 2,
        lhs_dilation=(stride, stride),
        dimension_numbers=("NCHW", "OIHW", "NCHW"),
    ) + bias[None, :, None, None]

    OH = (H - 1) * stride - 2 * padding + K
    assert out.shape == (N, Cout, OH, OH), out.shape
    np.testing.assert_allclose(np.asarray(out), np.asarray(ref),
                               rtol=1e-4, atol=1e-4)
    print("KERNEL_OK")
</pallas_src>

<mosaic_0001>
module attributes {stable_mosaic.version = 11 : i64} {
  func.func @probe(%arg0: memref<8x128xf32, #tpu.memory_space<vmem>>, %arg1: memref<8x128xf32, #tpu.memory_space<vmem>>) attributes {dimension_semantics = [], scalar_prefetch = 0 : i64, scratch_operands = 0 : i64, tpu.core_type = #tpu.core_type<tc>} {
    %c0 = arith.constant 0 : index
    %c0_0 = arith.constant 0 : index
    %0 = vector.load %arg0[%c0, %c0_0] : memref<8x128xf32, #tpu.memory_space<vmem>>, vector<8x128xf32>
    %c1_i32 = arith.constant 1 : i32
    %1 = tpu.dynamic_rotate %0 by %c1_i32 dim 1 : vector<8x128xf32>, i32 -> vector<8x128xf32>
    %c0_1 = arith.constant 0 : index
    %c0_2 = arith.constant 0 : index
    %2 = vector.load %arg1[%c0_1, %c0_2] : memref<8x128xf32, #tpu.memory_space<vmem>>, vector<8x128xf32>
    tpu.vector_store %arg1[%c0_1, %c0_2], %1 {strides = array<i32>} : memref<8x128xf32, #tpu.memory_space<vmem>>, vector<8x128xf32>,
    return
  }
}

</mosaic_0001>

<llo_original>
// kernel: tpu_custom_call.1
$region0: #{tpu_custom_call.1}
  #allocation0 [shape = 'u32[]', space=smem, size = 0x4, offset = 0x4, fixed_abs, tag = 'smem constant byte address 0x4 - core index']
  #allocation1 [shape = 'u32[144,128]{1,0:T(1,128)}', space=vmem, size = 0x12000, scoped, tag = 'internal scratch']
  %s0 = inlined_call_operand.hbm [shape: f32[8,128], index: 0, kind: input, shape index: {}]
  %s1 = inlined_call_operand.hbm [shape: f32[8,128], index: 1, kind: output, shape index: {}]
  %s2 = sld [smem:[#allocation0]]
  $region18: #{tpu_custom_call.1} parent=0
    _
  %s4 = ssub.s32 1, %s2
  %s5 = scalar_select 0, %s4, %s2
  $region1: #{tpu_custom_call.1} parent=0
    #allocation2 [shape = 'u8[4096]{0}', space=vmem, size = 0x1000, scoped, tag = 'input window, operand 0, single buffered']
    #allocation3 [shape = 's32[1]{0}', space=sflag, size = 0x4, scoped, tag = 'scoped memory for tpu_custom_call.1']
    #allocation4 [shape = 's32[1]{0}', space=sflag, size = 0x4, scoped, tag = 'scoped memory for tpu_custom_call.1']
    #allocation5 [shape = 'u8[4096]{0}', space=vmem, size = 0x1000, scoped, tag = 'output window, operand 0, single buffered']
    %6 = vsyncpa [#allocation3], 0
    %7 = vsyncpa [#allocation4], 0
    // Predicated region
    $region2: #{tpu_custom_call.1} parent=1 // pred_check
      _
    $region3: #{tpu_custom_call.1} parent=1 // pred_check_branch
      %9 = sbr.rel (0) target = $region5
    $region4: #{tpu_custom_call.1} parent=1 // pred_region
      %s11 = ssub.s32 128, 128
      %12 = vsyncadd [#allocation3], %s11
      %s14 = sshll.u32 [#allocation2], 4
      %s15 = int_to_ptr.vmem [resolvable:$true] %s14
      %17 = dma.hbm_to_vmem [thread:$0]  %s0, 128, %s15, [#allocation3]
    $region5: #{tpu_custom_call.1} parent=1 // pred_fallthru
      _
    // Predicated region
    $region6: #{tpu_custom_call.1} parent=1 // pred_check
      _
    $region7: #{tpu_custom_call.1} parent=1 // pred_check_branch
      %19 = sbr.rel (0) target = $region9
    $region8: #{tpu_custom_call.1} parent=1 // pred_region
      %20 = dma.done [#allocation3], 128
    $region9: #{tpu_custom_call.1} parent=1 // pred_fallthru
      _
    %v21 = vld [vmem:[#allocation2] sm:$0xff]
    %22 = vrot.lane.b32.xlu0 %v21, 1
    %v23 = vpop.permute.xlu0 %22
    %24 = vst [vmem:[#allocation5] sm:$0xff] %v23
    // Predicated region
    $region10: #{tpu_custom_call.1} parent=1 // pred_check
      _
    $region11: #{tpu_custom_call.1} parent=1 // pred_check_branch
      %26 = sbr.rel (0) target = $region13
    $region12: #{tpu_custom_call.1} parent=1 // pred_region
      %s28 = ssub.s32 128, 128
      %29 = vsyncadd [#allocation4], %s28
      %s31 = sshll.u32 [#allocation5], 4
      %s32 = int_to_ptr.vmem [resolvable:$true] %s31
      %34 = dma.vmem_to_hbm [thread:$0]  %s32, 128, %s1, [#allocation4]
    $region13: #{tpu_custom_call.1} parent=1 // pred_fallthru
      _
    // Predicated region
    $region14: #{tpu_custom_call.1} parent=1 // pred_check
      _
    $region15: #{tpu_custom_call.1} parent=1 // pred_check_branch
      %36 = sbr.rel (0) target = $region17
    $region16: #{tpu_custom_call.1} parent=1 // pred_region
      %37 = dma.done [#allocation4], 128
    $region17: #{tpu_custom_call.1} parent=1 // pred_fallthru
      _
    %38 = vsyncpa [#allocation3], 1
    %39 = vsyncpa [#allocation4], 1

</llo_original>
